<compile_context>
chip_gen: v5e
topology: v5e:2x2
jax: 0.10.0
libtpu: 0.0.40
codegen_flags: <defaults>
</compile_context>

<pallas_src>
import math

import numpy as np
import jax
import jax.numpy as jnp
from jax.experimental import pallas as pl
from jax.experimental.pallas import tpu as pltpu


# ----------------------------------------------------------------------------
# Pure-JAX sinusoidal timestep embedding (reference only; the kernel fuses it)
# ----------------------------------------------------------------------------
def timestep_embedding(timesteps, dim, max_period=10000):
    half = dim // 2
    freqs = jnp.exp(
        -math.log(max_period) * jnp.arange(half, dtype=jnp.float32) / half
    )
    args = timesteps.astype(jnp.float32)[:, None] * freqs[None, :]
    emb = jnp.concatenate([jnp.cos(args), jnp.sin(args)], axis=-1)
    if dim % 2:
        emb = jnp.concatenate([emb, jnp.zeros_like(emb[:, :1])], axis=-1)
    return emb


# ----------------------------------------------------------------------------
# Pallas kernel: fused  timestep_embedding -> linear_1 -> SiLU -> linear_2
# ----------------------------------------------------------------------------
def _control_add_embedding_kernel(ct_ref, const_ref, w1_ref, b_ref, w2_ref, o_ref):
    ct = ct_ref[...]                                 # (B, nct) f32
    nct = ct.shape[1]
    cst = const_ref[...]                             # (nct+1, Fp) f32
    # rows 0..nct-1: block-diagonal per-column frequencies
    # row  nct     : per-column phase offset (0 for cos cols, -pi/2 for sin cols)

    # phases[b, f] = control_type[b, k(f)] * freq(f)
    # Exact elementwise FMAs on the VPU (no MXU precision concerns), unrolled
    # over the small, static number of control types.
    phases = ct[:, 0:1] * cst[0:1, :]                # (B, Fp)
    for k in range(1, nct):
        phases = phases + ct[:, k:k + 1] * cst[k:k + 1, :]

    # Single transcendental: sin(x) == cos(x - pi/2) via the folded offset row.
    emb = jnp.cos(phases + cst[nct:nct + 1, :])      # f32, EUP slot
    emb = emb.astype(w1_ref.dtype)                   # == PyTorch `.to(dtype)` before linear_1

    bias = b_ref[...].astype(jnp.float32)            # (2, out_pad)
    b1 = bias[0:1, :]
    b2 = bias[1:2, :]

    # linear_1 -> SiLU -> linear_2 ; operands in model dtype, f32 accumulation.
    h = jnp.dot(emb, w1_ref[...], preferred_element_type=jnp.float32) + b1
    h = h * jax.nn.sigmoid(h)                        # SiLU kept in f32 (v5e-safe)
    o = jnp.dot(h.astype(w2_ref.dtype), w2_ref[...],
                preferred_element_type=jnp.float32) + b2
    o_ref[...] = o.astype(o_ref.dtype)


# ----------------------------------------------------------------------------
# Module wrapper (deterministic synthetic parameters)
# ----------------------------------------------------------------------------
def _round_up(x, m):
    return max(m, ((x + m - 1) // m) * m)


class ControlAddEmbeddingAdvPallas:
    def __init__(self, in_dim, out_dim, num_control_type, key,
                 dtype=jnp.bfloat16, max_period=10000):
        self.in_dim = in_dim
        self.out_dim = out_dim
        self.num_control_type = num_control_type
        self.dtype = dtype

        F = in_dim * num_control_type
        self.in_features = F
        self.F_pad = _round_up(F, 128)       # lane-dense embedding slab
        self.out_pad = _round_up(out_dim, 128)  # lane-dense hidden/output

        k1, k2, k3, k4 = jax.random.split(key, 4)
        # weights stored (in_features, out_features); kernel computes x @ W + b
        w1 = np.asarray(jax.random.normal(k1, (F, out_dim), jnp.float32)) \
            * (1.0 / math.sqrt(F))
        b1 = np.asarray(jax.random.normal(k2, (out_dim,), jnp.float32)) * 0.01
        w2 = np.asarray(jax.random.normal(k3, (out_dim, out_dim), jnp.float32)) \
            * (1.0 / math.sqrt(out_dim))
        b2 = np.asarray(jax.random.normal(k4, (out_dim,), jnp.float32)) * 0.01

        if in_dim % 2:
            # Odd in_dim: reference pads each per-type block with a zero column.
            # The fused kernel yields cos(offset)≈1 there instead; zero the
            # matching w1 rows so the contribution is exactly 0.
            pad_rows = [k * in_dim + (in_dim - 1) for k in range(num_control_type)]
            w1[pad_rows, :] = 0.0

        # zero-padded, lane-dense parameter tensors in the model dtype
        w1p = np.zeros((self.F_pad, self.out_pad), np.float32)
        w1p[:F, :out_dim] = w1
        w2p = np.zeros((self.out_pad, self.out_pad), np.float32)
        w2p[:out_dim, :out_dim] = w2
        bp = np.zeros((2, self.out_pad), np.float32)
        bp[0, :out_dim] = b1
        bp[1, :out_dim] = b2
        self.w1 = jnp.asarray(w1p, dtype=dtype)
        self.w2 = jnp.asarray(w2p, dtype=dtype)
        self.biases = jnp.asarray(bp, dtype=dtype)

        # Constant that folds the sinusoidal embedding into the kernel:
        #   const[k, k*in_dim + j] = freq(j)                (k < nct, zero elsewhere)
        #   const[nct, f]          = 0 (cos col) | -pi/2 (sin col)
        half = in_dim // 2
        freqs = np.exp(
            -math.log(max_period) * np.arange(half, dtype=np.float64) / half
        ).astype(np.float32)
        per_block_freq = np.zeros((in_dim,), np.float32)
        per_block_freq[:half] = freqs
        per_block_freq[half:2 * half] = freqs          # odd-dim pad col stays 0
        per_block_off = np.zeros((in_dim,), np.float32)
        per_block_off[half:2 * half] = -np.pi / 2.0    # sin(x) = cos(x - pi/2)
        const = np.zeros((num_control_type + 1, self.F_pad), np.float32)
        for k in range(num_control_type):
            const[k, k * in_dim:(k + 1) * in_dim] = per_block_freq
            const[num_control_type, k * in_dim:(k + 1) * in_dim] = per_block_off
        self.const = jnp.asarray(const)                # stays f32 (phase math is f32)

    def __call__(self, control_type=None):
        if control_type is None:
            control_type = jnp.zeros((self.num_control_type,), dtype=jnp.float32)
        ct = control_type.reshape(-1, self.num_control_type).astype(jnp.float32)
        B = ct.shape[0]

        operands = (ct, self.const, self.w1, self.biases, self.w2)
        out_bytes = B * self.out_pad * jnp.dtype(self.dtype).itemsize
        total_bytes = int(
            sum(int(np.prod(a.shape)) * jnp.dtype(a.dtype).itemsize for a in operands)
            + out_bytes
        )
        flops = int(
            2 * B * self.F_pad * self.out_pad            # linear_1
            + 2 * B * self.out_pad * self.out_pad        # linear_2
            + 2 * B * self.num_control_type * self.F_pad  # phase FMAs
        )
        transcendentals = int(B * self.F_pad + B * self.out_pad)  # cos + sigmoid

        vmem = pltpu.MemorySpace.VMEM
        out_padded = pl.pallas_call(
            _control_add_embedding_kernel,
            out_shape=jax.ShapeDtypeStruct((B, self.out_pad), self.dtype),
            in_specs=[pl.BlockSpec(memory_space=vmem) for _ in operands],
            out_specs=pl.BlockSpec(memory_space=vmem),
            compiler_params=pltpu.CompilerParams(
                vmem_limit_bytes=int(min(32 << 20, max(8 << 20, 4 * total_bytes)))),
            cost_estimate=pl.CostEstimate(
                flops=flops,
                transcendentals=transcendentals,
                bytes_accessed=total_bytes),
        )(*operands)
        # TODO(synk): once out_dim grows past ~1-2k (earliest on v7x: 64 MiB VMEM,
        # 2 TCs), switch to a "parallel" column-tiled grid over out_dim with
        # w2/output tiles sized for 64 MiB so the same plan fits all generations.
        return out_padded[:, :self.out_dim]


# pure-JAX reference for correctness checking (uses the same dtype-rounded,
# padded parameters the kernel sees, sliced back to the logical shapes)
def _reference(module, control_type):
    if control_type is None:
        control_type = jnp.zeros((module.num_control_type,), dtype=jnp.float32)
    F, D = module.in_features, module.out_dim
    c = timestep_embedding(control_type.reshape(-1), module.in_dim)
    c = c.astype(module.dtype).astype(jnp.float32).reshape(-1, module.num_control_type * module.in_dim)
    w1 = module.w1[:F, :D].astype(jnp.float32)
    w2 = module.w2[:D, :D].astype(jnp.float32)
    b1 = module.biases[0, :D].astype(jnp.float32)
    b2 = module.biases[1, :D].astype(jnp.float32)
    h = c @ w1 + b1
    h = h * jax.nn.sigmoid(h)
    return h @ w2 + b2


if __name__ == "__main__":
    key = jax.random.PRNGKey(0)
    k_params, k_ct = jax.random.split(key)

    # small shapes consistent with the module's forward
    in_dim = 32
    out_dim = 64
    num_control_type = 8
    batch = 2

    # control_type: per-sample flags/strengths, shape (B, num_control_type)
    control_type = jax.random.uniform(
        k_ct, (batch, num_control_type), dtype=jnp.float32
    )

    # f32 build (tight tolerance) and bf16 build (perf config, looser tolerance)
    for dtype, atol, rtol in ((jnp.float32, 1e-4, 1e-4),
                              (jnp.bfloat16, 2e-2, 2e-2)):
        module = ControlAddEmbeddingAdvPallas(
            in_dim, out_dim, num_control_type, k_params, dtype=dtype
        )
        out = jax.block_until_ready(module(control_type))
        assert out.shape == (batch, out_dim)
        ref = _reference(module, control_type)
        ok = jnp.allclose(out.astype(jnp.float32), ref.astype(jnp.float32),
                          atol=atol, rtol=rtol)
        assert bool(ok), (str(dtype), float(
            jnp.max(jnp.abs(out.astype(jnp.float32) - ref.astype(jnp.float32)))))

    print("KERNEL_OK")
</pallas_src>

<mosaic_0001>
module attributes {stable_mosaic.version = 11 : i64} {
  func.func @_control_add_embedding_kernel(%arg0: memref<2x8xf32, #tpu.memory_space<vmem>>, %arg1: memref<9x256xf32, #tpu.memory_space<vmem>>, %arg2: memref<256x128xf32, #tpu.memory_space<vmem>>, %arg3: memref<2x128xf32, #tpu.memory_space<vmem>>, %arg4: memref<128x128xf32, #tpu.memory_space<vmem>>, %arg5: memref<2x128xf32, #tpu.memory_space<vmem>>) attributes {dimension_semantics = [], scalar_prefetch = 0 : i64, scratch_operands = 0 : i64, tpu.core_type = #tpu.core_type<tc>} {
    %c0 = arith.constant 0 : index
    %c0_0 = arith.constant 0 : index
    %0 = vector.load %arg0[%c0, %c0_0] : memref<2x8xf32, #tpu.memory_space<vmem>>, vector<2x8xf32>
    %c0_1 = arith.constant 0 : index
    %c0_2 = arith.constant 0 : index
    %1 = vector.load %arg1[%c0_1, %c0_2] : memref<9x256xf32, #tpu.memory_space<vmem>>, vector<9x256xf32>
    %2 = vector.extract_strided_slice %0 {offsets = [0, 0], sizes = [2, 1], strides = [1, 1]} : vector<2x8xf32> to vector<2x1xf32>
    %3 = vector.extract_strided_slice %1 {offsets = [0, 0], sizes = [1, 256], strides = [1, 1]} : vector<9x256xf32> to vector<1x256xf32>
    %4 = vector.broadcast %2 : vector<2x1xf32> to vector<2x256xf32>
    %5 = vector.broadcast %3 : vector<1x256xf32> to vector<2x256xf32>
    %6 = arith.mulf %4, %5 : vector<2x256xf32>
    %7 = vector.extract_strided_slice %0 {offsets = [0, 1], sizes = [2, 1], strides = [1, 1]} : vector<2x8xf32> to vector<2x1xf32>
    %8 = vector.extract_strided_slice %1 {offsets = [1, 0], sizes = [1, 256], strides = [1, 1]} : vector<9x256xf32> to vector<1x256xf32>
    %9 = vector.broadcast %7 : vector<2x1xf32> to vector<2x256xf32>
    %10 = vector.broadcast %8 : vector<1x256xf32> to vector<2x256xf32>
    %11 = arith.mulf %9, %10 : vector<2x256xf32>
    %12 = arith.addf %6, %11 : vector<2x256xf32>
    %13 = vector.extract_strided_slice %0 {offsets = [0, 2], sizes = [2, 1], strides = [1, 1]} : vector<2x8xf32> to vector<2x1xf32>
    %14 = vector.extract_strided_slice %1 {offsets = [2, 0], sizes = [1, 256], strides = [1, 1]} : vector<9x256xf32> to vector<1x256xf32>
    %15 = vector.broadcast %13 : vector<2x1xf32> to vector<2x256xf32>
    %16 = vector.broadcast %14 : vector<1x256xf32> to vector<2x256xf32>
    %17 = arith.mulf %15, %16 : vector<2x256xf32>
    %18 = arith.addf %12, %17 : vector<2x256xf32>
    %19 = vector.extract_strided_slice %0 {offsets = [0, 3], sizes = [2, 1], strides = [1, 1]} : vector<2x8xf32> to vector<2x1xf32>
    %20 = vector.extract_strided_slice %1 {offsets = [3, 0], sizes = [1, 256], strides = [1, 1]} : vector<9x256xf32> to vector<1x256xf32>
    %21 = vector.broadcast %19 : vector<2x1xf32> to vector<2x256xf32>
    %22 = vector.broadcast %20 : vector<1x256xf32> to vector<2x256xf32>
    %23 = arith.mulf %21, %22 : vector<2x256xf32>
    %24 = arith.addf %18, %23 : vector<2x256xf32>
    %25 = vector.extract_strided_slice %0 {offsets = [0, 4], sizes = [2, 1], strides = [1, 1]} : vector<2x8xf32> to vector<2x1xf32>
    %26 = vector.extract_strided_slice %1 {offsets = [4, 0], sizes = [1, 256], strides = [1, 1]} : vector<9x256xf32> to vector<1x256xf32>
    %27 = vector.broadcast %25 : vector<2x1xf32> to vector<2x256xf32>
    %28 = vector.broadcast %26 : vector<1x256xf32> to vector<2x256xf32>
    %29 = arith.mulf %27, %28 : vector<2x256xf32>
    %30 = arith.addf %24, %29 : vector<2x256xf32>
    %31 = vector.extract_strided_slice %0 {offsets = [0, 5], sizes = [2, 1], strides = [1, 1]} : vector<2x8xf32> to vector<2x1xf32>
    %32 = vector.extract_strided_slice %1 {offsets = [5, 0], sizes = [1, 256], strides = [1, 1]} : vector<9x256xf32> to vector<1x256xf32>
    %33 = vector.broadcast %31 : vector<2x1xf32> to vector<2x256xf32>
    %34 = vector.broadcast %32 : vector<1x256xf32> to vector<2x256xf32>
    %35 = arith.mulf %33, %34 : vector<2x256xf32>
    %36 = arith.addf %30, %35 : vector<2x256xf32>
    %37 = vector.extract_strided_slice %0 {offsets = [0, 6], sizes = [2, 1], strides = [1, 1]} : vector<2x8xf32> to vector<2x1xf32>
    %38 = vector.extract_strided_slice %1 {offsets = [6, 0], sizes = [1, 256], strides = [1, 1]} : vector<9x256xf32> to vector<1x256xf32>
    %39 = vector.broadcast %37 : vector<2x1xf32> to vector<2x256xf32>
    %40 = vector.broadcast %38 : vector<1x256xf32> to vector<2x256xf32>
    %41 = arith.mulf %39, %40 : vector<2x256xf32>
    %42 = arith.addf %36, %41 : vector<2x256xf32>
    %43 = vector.extract_strided_slice %0 {offsets = [0, 7], sizes = [2, 1], strides = [1, 1]} : vector<2x8xf32> to vector<2x1xf32>
    %44 = vector.extract_strided_slice %1 {offsets = [7, 0], sizes = [1, 256], strides = [1, 1]} : vector<9x256xf32> to vector<1x256xf32>
    %45 = vector.broadcast %43 : vector<2x1xf32> to vector<2x256xf32>
    %46 = vector.broadcast %44 : vector<1x256xf32> to vector<2x256xf32>
    %47 = arith.mulf %45, %46 : vector<2x256xf32>
    %48 = arith.addf %42, %47 : vector<2x256xf32>
    %49 = vector.extract_strided_slice %1 {offsets = [8, 0], sizes = [1, 256], strides = [1, 1]} : vector<9x256xf32> to vector<1x256xf32>
    %50 = vector.broadcast %49 : vector<1x256xf32> to vector<2x256xf32>
    %51 = arith.addf %48, %50 : vector<2x256xf32>
    %52 = math.cos %51 : vector<2x256xf32>
    %c0_3 = arith.constant 0 : index
    %c0_4 = arith.constant 0 : index
    %53 = vector.load %arg3[%c0_3, %c0_4] : memref<2x128xf32, #tpu.memory_space<vmem>>, vector<2x128xf32>
    %54 = vector.extract_strided_slice %53 {offsets = [0, 0], sizes = [1, 128], strides = [1, 1]} : vector<2x128xf32> to vector<1x128xf32>
    %55 = vector.extract_strided_slice %53 {offsets = [1, 0], sizes = [1, 128], strides = [1, 1]} : vector<2x128xf32> to vector<1x128xf32>
    %c0_5 = arith.constant 0 : index
    %c0_6 = arith.constant 0 : index
    %56 = vector.load %arg2[%c0_5, %c0_6] : memref<256x128xf32, #tpu.memory_space<vmem>>, vector<256x128xf32>
    %cst = arith.constant dense<0.000000e+00> : vector<2x128xf32>
    %57 = tpu.matmul %52, %56, %cst {dimension_numbers = #tpu.dot_dimension_numbers<[1], [0], [0], [1], [0, 0, 1, 1], [], []>} : vector<2x256xf32>, vector<256x128xf32>, vector<2x128xf32> -> vector<2x128xf32>
    %58 = vector.broadcast %54 : vector<1x128xf32> to vector<2x128xf32>
    %59 = arith.addf %57, %58 : vector<2x128xf32>
    %60 = arith.negf %59 : vector<2x128xf32>
    %61 = math.exp %60 : vector<2x128xf32>
    %cst_7 = arith.constant 1.000000e+00 : f32
    %62 = vector.broadcast %cst_7 : f32 to vector<2x128xf32>
    %63 = arith.addf %62, %61 : vector<2x128xf32>
    %64 = arith.divf %62, %63 : vector<2x128xf32>
    %65 = arith.mulf %59, %64 : vector<2x128xf32>
    %c0_8 = arith.constant 0 : index
    %c0_9 = arith.constant 0 : index
    %66 = vector.load %arg4[%c0_8, %c0_9] : memref<128x128xf32, #tpu.memory_space<vmem>>, vector<128x128xf32>
    %cst_10 = arith.constant dense<0.000000e+00> : vector<2x128xf32>
    %67 = tpu.matmul %65, %66, %cst_10 {dimension_numbers = #tpu.dot_dimension_numbers<[1], [0], [0], [1], [0, 0, 1, 1], [], []>} : vector<2x128xf32>, vector<128x128xf32>, vector<2x128xf32> -> vector<2x128xf32>
    %68 = vector.broadcast %55 : vector<1x128xf32> to vector<2x128xf32>
    %69 = arith.addf %67, %68 : vector<2x128xf32>
    %c0_11 = arith.constant 0 : index
    %c0_12 = arith.constant 0 : index
    %70 = vector.load %arg5[%c0_11, %c0_12] : memref<2x128xf32, #tpu.memory_space<vmem>>, vector<2x128xf32>
    tpu.vector_store %arg5[%c0_11, %c0_12], %69 {strides = array<i32>} : memref<2x128xf32, #tpu.memory_space<vmem>>, vector<2x128xf32>,
    return
  }
}

</mosaic_0001>

<llo_original>
// kernel: tpu_custom_call.1
$region0: #{tpu_custom_call.1}
  #allocation0 [shape = 'u32[]', space=smem, size = 0x4, offset = 0x4, fixed_abs, tag = 'smem constant byte address 0x4 - core index']
  #allocation1 [shape = 'u32[72,128]{1,0:T(1,128)}', space=vmem, size = 0x9000, scoped, tag = 'internal scratch']
  %s0 = inlined_call_operand.hbm [shape: f32[2,8], index: 0, kind: input, shape index: {}]
  %s1 = inlined_call_operand.hbm [shape: f32[9,256], index: 1, kind: input, shape index: {}]
  %s2 = inlined_call_operand.hbm [shape: f32[256,128], index: 2, kind: input, shape index: {}]
  %s3 = inlined_call_operand.vmem [shape: f32[2,128], index: 3, kind: input, shape index: {}]
  %s4 = inlined_call_operand.hbm [shape: f32[128,128], index: 4, kind: input, shape index: {}]
  %s5 = inlined_call_operand.hbm [shape: f32[2,128], index: 5, kind: output, shape index: {}]
  %s6 = sld [smem:[#allocation0]]
  $region46: #{tpu_custom_call.1} parent=0
    _
  %s8 = ssub.s32 1, %s6
  %s9 = scalar_select 0, %s8, %s6
  $region1: #{tpu_custom_call.1} parent=0
    #allocation2 [shape = 'u8[1024]{0}', space=vmem, size = 0x400, scoped, tag = 'input window, operand 0, single buffered']
    #allocation3 [shape = 's32[1]{0}', space=sflag, size = 0x4, scoped, tag = 'scoped memory for tpu_custom_call.1']
    #allocation4 [shape = 's32[1]{0}', space=sflag, size = 0x4, scoped, tag = 'scoped memory for tpu_custom_call.1']
    #allocation5 [shape = 'u8[16384]{0}', space=vmem, size = 0x4000, scoped, tag = 'input window, operand 1, single buffered']
    #allocation6 [shape = 's32[1]{0}', space=sflag, size = 0x4, scoped, tag = 'scoped memory for tpu_custom_call.1']
    #allocation7 [shape = 'u8[131072]{0}', space=vmem, size = 0x20000, scoped, tag = 'input window, operand 2, single buffered']
    #allocation8 [shape = 'u8[65536]{0}', space=vmem, size = 0x10000, scoped, tag = 'input window, operand 4, single buffered']
    #allocation9 [shape = 's32[1]{0}', space=sflag, size = 0x4, scoped, tag = 'scoped memory for tpu_custom_call.1']
    #allocation10 [shape = 'u8[1024]{0}', space=vmem, size = 0x400, scoped, tag = 'output window, operand 0, single buffered']
    %10 = vsyncpa [#allocation3], 0
    %11 = vsyncpa [#allocation6], 0
    %12 = vsyncpa [#allocation9], 0
    %13 = vsyncpa [#allocation4], 0
    // Predicated region
    $region2: #{tpu_custom_call.1} parent=1 // pred_check
      _
    $region3: #{tpu_custom_call.1} parent=1 // pred_check_branch
      %15 = sbr.rel (0) target = $region5
    $region4: #{tpu_custom_call.1} parent=1 // pred_region
      %17 = vsyncadd [#allocation3], 0
      %s19 = sshll.u32 %s0, 4
      %s20 = int_to_ptr.hbm [resolvable:$true] %s19
      %s21 = sshll.u32 [#allocation2], 4
      %s22 = int_to_ptr.vmem [resolvable:$true] %s21
      %24 = dma.hbm_to_vmem [thread:$0]  %s20, 32, %s22, [#allocation3]
    $region5: #{tpu_custom_call.1} parent=1 // pred_fallthru
      _
    // Predicated region
    $region6: #{tpu_custom_call.1} parent=1 // pred_check
      _
    $region7: #{tpu_custom_call.1} parent=1 // pred_check_branch
      %26 = sbr.rel (0) target = $region9
    $region8: #{tpu_custom_call.1} parent=1 // pred_region
      %28 = vsyncadd [#allocation6], 0
      %s29 = sshll.u32 %s1, 4
      %s30 = int_to_ptr.hbm [resolvable:$true] %s29
      %s31 = sshll.u32 [#allocation5], 4
      %s32 = int_to_ptr.vmem [resolvable:$true] %s31
      %37 = dma.hbm_to_vmem [thread:$0]  %s30, 512, %s32, [#allocation6], 256, 256, 16
    $region9: #{tpu_custom_call.1} parent=1 // pred_fallthru
      _
    // Predicated region
    $region10: #{tpu_custom_call.1} parent=1 // pred_check
      _
    $region11: #{tpu_custom_call.1} parent=1 // pred_check_branch
      %39 = sbr.rel (0) target = $region13
    $region12: #{tpu_custom_call.1} parent=1 // pred_region
      %41 = vsyncadd [#allocation6], 0
      %s42 = sshll.u32 %s2, 4
      %s43 = int_to_ptr.hbm [resolvable:$true] %s42
      %s44 = sshll.u32 [#allocation7], 4
      %s45 = int_to_ptr.vmem [resolvable:$true] %s44
      %50 = dma.hbm_to_vmem [thread:$0]  %s43, 4096, %s45, [#allocation6], 128, 128, 8
    $region13: #{tpu_custom_call.1} parent=1 // pred_fallthru
      _
    // Predicated region
    $region14: #{tpu_custom_call.1} parent=1 // pred_check
      _
    $region15: #{tpu_custom_call.1} parent=1 // pred_check_branch
      %52 = sbr.rel (0) target = $region17
    $region16: #{tpu_custom_call.1} parent=1 // pred_region
      _
    $region17: #{tpu_custom_call.1} parent=1 // pred_fallthru
      _
    // Predicated region
    $region18: #{tpu_custom_call.1} parent=1 // pred_check
      _
    $region19: #{tpu_custom_call.1} parent=1 // pred_check_branch
      %54 = sbr.rel (0) target = $region21
    $region20: #{tpu_custom_call.1} parent=1 // pred_region
      %56 = vsyncadd [#allocation9], 0
      %s57 = sshll.u32 %s4, 4
      %s58 = int_to_ptr.hbm [resolvable:$true] %s57
      %s59 = sshll.u32 [#allocation8], 4
      %s60 = int_to_ptr.vmem [resolvable:$true] %s59
      %65 = dma.hbm_to_vmem [thread:$0]  %s58, 2048, %s60, [#allocation9], 128, 128, 8
    $region21: #{tpu_custom_call.1} parent=1 // pred_fallthru
      _
    // Predicated region
    $region22: #{tpu_custom_call.1} parent=1 // pred_check
      _
    $region23: #{tpu_custom_call.1} parent=1 // pred_check_branch
      %67 = sbr.rel (0) target = $region25
    $region24: #{tpu_custom_call.1} parent=1 // pred_region
      %69 = dma.done [#allocation3], 32
    $region25: #{tpu_custom_call.1} parent=1 // pred_fallthru
      _
    // Predicated region
    $region26: #{tpu_custom_call.1} parent=1 // pred_check
      _
    $region27: #{tpu_custom_call.1} parent=1 // pred_check_branch
      %71 = sbr.rel (0) target = $region29
    $region28: #{tpu_custom_call.1} parent=1 // pred_region
      %73 = dma.done [#allocation6], 512
    $region29: #{tpu_custom_call.1} parent=1 // pred_fallthru
      _
    // Predicated region
    $region30: #{tpu_custom_call.1} parent=1 // pred_check
      _
    $region31: #{tpu_custom_call.1} parent=1 // pred_check_branch
      %75 = sbr.rel (0) target = $region33
    $region32: #{tpu_custom_call.1} parent=1 // pred_region
      %77 = dma.done [#allocation6], 4096
    $region33: #{tpu_custom_call.1} parent=1 // pred_fallthru
      _
    // Predicated region
    $region34: #{tpu_custom_call.1} parent=1 // pred_check
      _
    $region35: #{tpu_custom_call.1} parent=1 // pred_check_branch
      %79 = sbr.rel (0) target = $region37
    $region36: #{tpu_custom_call.1} parent=1 // pred_region
      %81 = dma.done [#allocation9], 2048
    $region37: #{tpu_custom_call.1} parent=1 // pred_fallthru
      _
    %v82 = vld [vmem:[#allocation2] sm:$0x3]
    %v83 = vld [vmem:[#allocation5] sm:$0xff]
    %v84 = vld [vmem:[#allocation5 + $0x8] sm:$0xff]
    %v85 = vld [vmem:[#allocation5 + $0x10] sm:$0x1]
    %v86 = vld [vmem:[#allocation5 + $0x18] sm:$0x1]
    %88 = vset.pattern.permute.xlu0 0
    %89 = vperm.xlu0 %88, %v82
    %v90 = vpop.permute.xlu0 %89
    %v92 = vperm.slane %v83, 0
    %v93 = vperm.slane %v84, 0
    %v94 = vmul.f32 %v90, %v92
    %v95 = vmul.f32 %v90, %v93
    %96 = vset.pattern.permute.xlu0 1
    %97 = vperm.xlu0 %96, %v82
    %v98 = vpop.permute.xlu0 %97
    %v100 = vperm.slane %v83, 1
    %v101 = vperm.slane %v84, 1
    %v102 = vmul.f32 %v98, %v100
    %v103 = vmul.f32 %v98, %v101
    %v104 = vadd.f32 %v94, %v102
    %v105 = vadd.f32 %v95, %v103
    %106 = vset.pattern.permute.xlu0 2
    %107 = vperm.xlu0 %106, %v82
    %v108 = vpop.permute.xlu0 %107
    %v110 = vperm.slane %v83, 2
    %v111 = vperm.slane %v84, 2
    %v112 = vmul.f32 %v108, %v110
    %v113 = vmul.f32 %v108, %v111
    %v114 = vadd.f32 %v104, %v112
    %v115 = vadd.f32 %v105, %v113
    %116 = vset.pattern.permute.xlu0 3
    %117 = vperm.xlu0 %116, %v82
    %v118 = vpop.permute.xlu0 %117
    %v120 = vperm.slane %v83, 3
    %v121 = vperm.slane %v84, 3
    %v122 = vmul.f32 %v118, %v120
    %v123 = vmul.f32 %v118, %v121
    %v124 = vadd.f32 %v114, %v122
    %v125 = vadd.f32 %v115, %v123
    %126 = vset.pattern.permute.xlu0 4
    %127 = vperm.xlu0 %126, %v82
    %v128 = vpop.permute.xlu0 %127
    %v130 = vperm.slane %v83, 4
    %v131 = vperm.slane %v84, 4
    %v132 = vmul.f32 %v128, %v130
    %v133 = vmul.f32 %v128, %v131
    %v134 = vadd.f32 %v124, %v132
    %v135 = vadd.f32 %v125, %v133
    %136 = vset.pattern.permute.xlu0 5
    %137 = vperm.xlu0 %136, %v82
    %v138 = vpop.permute.xlu0 %137
    %v140 = vperm.slane %v83, 5
    %v141 = vperm.slane %v84, 5
    %v142 = vmul.f32 %v138, %v140
    %v143 = vmul.f32 %v138, %v141
    %v144 = vadd.f32 %v134, %v142
    %v145 = vadd.f32 %v135, %v143
    %146 = vset.pattern.permute.xlu0 6
    %147 = vperm.xlu0 %146, %v82
    %v148 = vpop.permute.xlu0 %147
    %v150 = vperm.slane %v83, 6
    %v151 = vperm.slane %v84, 6
    %v152 = vmul.f32 %v148, %v150
    %v153 = vmul.f32 %v148, %v151
    %v154 = vadd.f32 %v144, %v152
    %v155 = vadd.f32 %v145, %v153
    %156 = vset.pattern.permute.xlu0 7
    %157 = vperm.xlu0 %156, %v82
    %v158 = vpop.permute.xlu0 %157
    %v160 = vperm.slane %v83, 7
    %v161 = vperm.slane %v84, 7
    %v162 = vmul.f32 %v158, %v160
    %v163 = vmul.f32 %v158, %v161
    %v164 = vadd.f32 %v154, %v162
    %v165 = vadd.f32 %v155, %v163
    %v166 = vperm.slane %v85, 0
    %v167 = vperm.slane %v86, 0
    %v168 = vadd.f32 %v164, %v166
    %v169 = vadd.f32 %v165, %v167
    %v170 = vand.u32 2147483647, %v168
    %vm171 = vcmp.le.f32.partialorder %v170, 0.7853982
    %vm172 = vcmp.lt.s32.totalorder %v168, 0
    %v173 = vand.u32 %v168, 2139095040
    %v174 = vshrl.u32 %v173, 23
    %v175 = vsub.s32 %v174, 127
    %v176 = vand.u32 2147483647, %v168
    %v177 = vand.u32 %v176, 8388607
    %v178 = vor.u32 %v177, 8388608
    %v179 = vsub.s32 0, %v178
    %v180 = vadd.s32 %v175, 1
    %vm181 = vcmp.gt.s32.totalorder %v180, 0
    %v182 = vsel %vm181, %v180, 0
    %v183 = vshrl.u32 %v182, 5
    %v184 = vand.u32 %v182, 31
    %v185 = vsub.s32 32, %v184
    %v186 = vshrl.u32 683565275, %v185
    %v187 = vshll.u32 683565275, %v184
    %v188 = vshrl.u32 2475754826, %v185
    %v189 = vor.u32 %v187, %v188
    %v190 = vshll.u32 2475754826, %v184
    %v191 = vshrl.u32 2131351028, %v185
    %v192 = vor.u32 %v190, %v191
    %v193 = vshll.u32 2131351028, %v184
    %v194 = vshrl.u32 2102212464, %v185
    %v195 = vor.u32 %v193, %v194
    %v196 = vshll.u32 2102212464, %v184
    %v197 = vshrl.u32 920167782, %v185
    %v198 = vor.u32 %v196, %v197
    %v199 = vshll.u32 920167782, %v184
    %v200 = vshrl.u32 1326507024, %v185
    %v201 = vor.u32 %v199, %v200
    %vm202 = vcmp.lt.s32.totalorder %v183, 1
    %vm203 = vcmp.lt.s32.totalorder %v183, 2
    %vm204 = vcmp.lt.s32.totalorder %v183, 3
    %vm205 = vcmp.lt.s32.totalorder %v183, 4
    %v206 = vsel %vm202, %v186, %v189
    %v207 = vsel %vm205, %v195, 2102212464
    %v208 = vsel %vm204, %v192, %v207
    %v209 = vsel %vm203, %v206, %v208
    %v210 = vsel %vm202, %v189, %v192
    %v211 = vsel %vm205, %v198, 920167782
    %v212 = vsel %vm204, %v195, %v211
    %v213 = vsel %vm203, %v210, %v212
    %v214 = vsel %vm202, %v192, %v195
    %v215 = vsel %vm205, %v201, 1326507024
    %v216 = vsel %vm204, %v198, %v215
    %v217 = vsel %vm203, %v214, %v216
    %v218 = vshll.u32 %v178, 8
    %v219 = vand.u32 %v218, 65535
    %v220 = vshrl.u32 %v218, 16
    %v221 = vand.u32 %v217, 65535
    %v222 = vshrl.u32 %v217, 16
    %v223 = vmul.u32 %v219, %v221
    %v224 = vmul.u32 %v219, %v222
    %v225 = vmul.u32 %v220, %v221
    %v226 = vmul.u32 %v220, %v222
    %v227 = vshll.u32 %v224, 16
    %v228 = vshrl.u32 %v224, 16
    %v229 = vshll.u32 %v225, 16
    %v230 = vshrl.u32 %v225, 16
    %vm231 = vc.u32 %v223, %v227
    %v232 = vsel %vm231, 1, 0
    %v233 = vadd.s32 %v223, %v227
    %v234 = vadd.s32 %v226, %v232
    %vm235 = vc.u32 %v233, %v229
    %v236 = vsel %vm235, 1, 0
    %v237 = vadd.s32 %v233, %v229
    %v238 = vadd.s32 %v234, %v236
    %v239 = vadd.s32 %v238, %v228
    %v240 = vadd.s32 %v239, %v230
    %v241 = vand.u32 %v218, 65535
    %v242 = vshrl.u32 %v218, 16
    %v243 = vand.u32 %v213, 65535
    %v244 = vshrl.u32 %v213, 16
    %v245 = vmul.u32 %v241, %v243
    %v246 = vmul.u32 %v241, %v244
    %v247 = vmul.u32 %v242, %v243
    %v248 = vmul.u32 %v242, %v244
    %v249 = vshll.u32 %v246, 16
    %v250 = vshrl.u32 %v246, 16
    %v251 = vshll.u32 %v247, 16
    %v252 = vshrl.u32 %v247, 16
    %vm253 = vc.u32 %v245, %v249
    %v254 = vsel %vm253, 1, 0
    %v255 = vadd.s32 %v245, %v249
    %v256 = vadd.s32 %v248, %v254
    %vm257 = vc.u32 %v255, %v251
    %v258 = vsel %vm257, 1, 0
    %v259 = vadd.s32 %v255, %v251
    %v260 = vadd.s32 %v256, %v258
    %v261 = vadd.s32 %v260, %v250
    %v262 = vadd.s32 %v261, %v252
    %v263 = vmul.u32 %v218, %v209
    %v264 = vadd.s32 %v240, %v259
    %vm265 = vc.u32 %v240, %v259
    %v266 = vadd.s32 %v262, 1
    %v267 = vsel %vm265, %v266, %v262
    %v268 = vadd.s32 %v263, %v267
    %v269 = vadd.s32 %v268, 536870912
    %v270 = vshrl.u32 %v269, 30
    %v271 = vshll.u32 %v270, 30
    %v272 = vsub.s32 %v268, %v271
    %vm273 = vcmp.lt.s32.totalorder %v272, 0
    %v274 = vsub.s32 0, %v272
    %v275 = vsel %vm273, %v274, %v272
    %v276 = vclz %v275
    %v277 = vsub.s32 %v276, 2
    %vm278 = vcmp.gt.s32.totalorder 0, %v277
    %v279 = vsel %vm278, 0, %v277
    %v280 = vsub.s32 32, %v279
    %v281 = vshll.u32 %v272, %v279
    %v282 = vshrl.u32 %v264, %v280
    %v283 = vor.u32 %v281, %v282
    %v284 = vsub.s32 4294967266, %v279
    %v285 = vadd.s32 %v284, 127
    %v286 = vshll.u32 %v285, 23
    %v287 = vor.u32 4788187, %v286
    %v288 = vand.u32 2147483647, %v287
    %v290 = vcvt.s32.f32 %v283
    %v291 = vmul.f32 %v290, %v288
    %v292 = vxor.u32 %v291, 2147483648
    %v293 = vsel %vm172, %v292, %v291
    %v294 = vsub.s32 4, %v270
    %v295 = vsel %vm172, %v294, %v270
    %v296 = vsel %vm171, %v168, %v293
    %v297 = vsel %vm171, 0, %v295
    %v298 = vmul.f32 %v296, %v296
    %v299 = vmul.f32 %v298, -0.001358992
    %v300 = vadd.f32 %v299, 0.041655596
    %v301 = vmul.f32 %v298, %v300
    %v302 = vadd.f32 %v301, -0.4999988
    %v303 = vmul.f32 %v298, %v302
    %v304 = vadd.f32 1.0, %v303
    %v305 = vmul.f32 %v296, %v296
    %v306 = vmul.f32 %v305, -0.00019511016
    %v307 = vadd.f32 %v306, 0.008332121
    %v308 = vmul.f32 %v305, %v307
    %v309 = vadd.f32 %v308, -0.16666654
    %v310 = vmul.f32 %v305, %v309
    %v311 = vadd.f32 %v310, 1.0
    %v312 = vmul.f32 %v311, %v296
    %vm313 = vweird.f32 %v168
    %v314 = vand.u32 %v297, 3
    %vm315 = vcmp.lt.s32.totalorder %v314, 2
    %vm316 = vcmp.eq.s32.totalorder %v314, 0
    %v317 = vxor.u32 %v312, 2147483648
    %v318 = vsel %vm316, %v304, %v317
    %vm319 = vcmp.eq.s32.totalorder %v314, 2
    %v320 = vxor.u32 %v304, 2147483648
    %v321 = vsel %vm319, %v320, %v312
    %v322 = vsel %vm315, %v318, %v321
    %v323 = vsel %vm313, nan, %v322
    %v324 = vand.u32 2147483647, %v169
    %vm325 = vcmp.le.f32.partialorder %v324, 0.7853982
    %vm326 = vcmp.lt.s32.totalorder %v169, 0
    %v327 = vand.u32 %v169, 2139095040
    %v328 = vshrl.u32 %v327, 23
    %v329 = vsub.s32 %v328, 127
    %v330 = vand.u32 2147483647, %v169
    %v331 = vand.u32 %v330, 8388607
    %v332 = vor.u32 %v331, 8388608
    %v333 = vsub.s32 0, %v332
    %v334 = vadd.s32 %v329, 1
    %vm335 = vcmp.gt.s32.totalorder %v334, 0
    %v336 = vsel %vm335, %v334, 0
    %v337 = vshrl.u32 %v336, 5
    %v338 = vand.u32 %v336, 31
    %v339 = vsub.s32 32, %v338
    %v340 = vshrl.u32 683565275, %v339
    %v341 = vshll.u32 683565275, %v338
    %v342 = vshrl.u32 2475754826, %v339
    %v343 = vor.u32 %v341, %v342
    %v344 = vshll.u32 2475754826, %v338
    %v345 = vshrl.u32 2131351028, %v339
    %v346 = vor.u32 %v344, %v345
    %v347 = vshll.u32 2131351028, %v338
    %v348 = vshrl.u32 2102212464, %v339
    %v349 = vor.u32 %v347, %v348
    %v350 = vshll.u32 2102212464, %v338
    %v351 = vshrl.u32 920167782, %v339
    %v352 = vor.u32 %v350, %v351
    %v353 = vshll.u32 920167782, %v338
    %v354 = vshrl.u32 1326507024, %v339
    %v355 = vor.u32 %v353, %v354
    %vm356 = vcmp.lt.s32.totalorder %v337, 1
    %vm357 = vcmp.lt.s32.totalorder %v337, 2
    %vm358 = vcmp.lt.s32.totalorder %v337, 3
    %vm359 = vcmp.lt.s32.totalorder %v337, 4
    %v360 = vsel %vm356, %v340, %v343
    %v361 = vsel %vm359, %v349, 2102212464
    %v362 = vsel %vm358, %v346, %v361
    %v363 = vsel %vm357, %v360, %v362
    %v364 = vsel %vm356, %v343, %v346
    %v365 = vsel %vm359, %v352, 920167782
    %v366 = vsel %vm358, %v349, %v365
    %v367 = vsel %vm357, %v364, %v366
    %v368 = vsel %vm356, %v346, %v349
    %v369 = vsel %vm359, %v355, 1326507024
    %v370 = vsel %vm358, %v352, %v369
    %v371 = vsel %vm357, %v368, %v370
    %v372 = vshll.u32 %v332, 8
    %v373 = vand.u32 %v372, 65535
    %v374 = vshrl.u32 %v372, 16
    %v375 = vand.u32 %v371, 65535
    %v376 = vshrl.u32 %v371, 16
    %v377 = vmul.u32 %v373, %v375
    %v378 = vmul.u32 %v373, %v376
    %v379 = vmul.u32 %v374, %v375
    %v380 = vmul.u32 %v374, %v376
    %v381 = vshll.u32 %v378, 16
    %v382 = vshrl.u32 %v378, 16
    %v383 = vshll.u32 %v379, 16
    %v384 = vshrl.u32 %v379, 16
    %vm385 = vc.u32 %v377, %v381
    %v386 = vsel %vm385, 1, 0
    %v387 = vadd.s32 %v377, %v381
    %v388 = vadd.s32 %v380, %v386
    %vm389 = vc.u32 %v387, %v383
    %v390 = vsel %vm389, 1, 0
    %v391 = vadd.s32 %v387, %v383
    %v392 = vadd.s32 %v388, %v390
    %v393 = vadd.s32 %v392, %v382
    %v394 = vadd.s32 %v393, %v384
    %v395 = vand.u32 %v372, 65535
    %v396 = vshrl.u32 %v372, 16
    %v397 = vand.u32 %v367, 65535
    %v398 = vshrl.u32 %v367, 16
    %v399 = vmul.u32 %v395, %v397
    %v400 = vmul.u32 %v395, %v398
    %v401 = vmul.u32 %v396, %v397
    %v402 = vmul.u32 %v396, %v398
    %v403 = vshll.u32 %v400, 16
    %v404 = vshrl.u32 %v400, 16
    %v405 = vshll.u32 %v401, 16
    %v406 = vshrl.u32 %v401, 16
    %vm407 = vc.u32 %v399, %v403
    %v408 = vsel %vm407, 1, 0
    %v409 = vadd.s32 %v399, %v403
    %v410 = vadd.s32 %v402, %v408
    %vm411 = vc.u32 %v409, %v405
    %v412 = vsel %vm411, 1, 0
    %v413 = vadd.s32 %v409, %v405
    %v414 = vadd.s32 %v410, %v412
    %v415 = vadd.s32 %v414, %v404
    %v416 = vadd.s32 %v415, %v406
    %v417 = vmul.u32 %v372, %v363
    %v418 = vadd.s32 %v394, %v413
    %vm419 = vc.u32 %v394, %v413
    %v420 = vadd.s32 %v416, 1
    %v421 = vsel %vm419, %v420, %v416
    %v422 = vadd.s32 %v417, %v421
    %v423 = vadd.s32 %v422, 536870912
    %v424 = vshrl.u32 %v423, 30
    %v425 = vshll.u32 %v424, 30
    %v426 = vsub.s32 %v422, %v425
    %vm427 = vcmp.lt.s32.totalorder %v426, 0
    %v428 = vsub.s32 0, %v426
    %v429 = vsel %vm427, %v428, %v426
    %v430 = vclz %v429
    %v431 = vsub.s32 %v430, 2
    %vm432 = vcmp.gt.s32.totalorder 0, %v431
    %v433 = vsel %vm432, 0, %v431
    %v434 = vsub.s32 32, %v433
    %v435 = vshll.u32 %v426, %v433
    %v436 = vshrl.u32 %v418, %v434
    %v437 = vor.u32 %v435, %v436
    %v438 = vsub.s32 4294967266, %v433
    %v439 = vadd.s32 %v438, 127
    %v440 = vshll.u32 %v439, 23
    %v441 = vor.u32 4788187, %v440
    %v442 = vand.u32 2147483647, %v441
    %v444 = vcvt.s32.f32 %v437
    %v445 = vmul.f32 %v444, %v442
    %v446 = vxor.u32 %v445, 2147483648
    %v447 = vsel %vm326, %v446, %v445
    %v448 = vsub.s32 4, %v424
    %v449 = vsel %vm326, %v448, %v424
    %v450 = vsel %vm325, %v169, %v447
    %v451 = vsel %vm325, 0, %v449
    %v452 = vmul.f32 %v450, %v450
    %v453 = vmul.f32 %v452, -0.001358992
    %v454 = vadd.f32 %v453, 0.041655596
    %v455 = vmul.f32 %v452, %v454
    %v456 = vadd.f32 %v455, -0.4999988
    %v457 = vmul.f32 %v452, %v456
    %v458 = vadd.f32 1.0, %v457
    %v459 = vmul.f32 %v450, %v450
    %v460 = vmul.f32 %v459, -0.00019511016
    %v461 = vadd.f32 %v460, 0.008332121
    %v462 = vmul.f32 %v459, %v461
    %v463 = vadd.f32 %v462, -0.16666654
    %v464 = vmul.f32 %v459, %v463
    %v465 = vadd.f32 %v464, 1.0
    %v466 = vmul.f32 %v465, %v450
    %vm467 = vweird.f32 %v169
    %v468 = vand.u32 %v451, 3
    %vm469 = vcmp.lt.s32.totalorder %v468, 2
    %vm470 = vcmp.eq.s32.totalorder %v468, 0
    %v471 = vxor.u32 %v466, 2147483648
    %v472 = vsel %vm470, %v458, %v471
    %vm473 = vcmp.eq.s32.totalorder %v468, 2
    %v474 = vxor.u32 %v458, 2147483648
    %v475 = vsel %vm473, %v474, %v466
    %v476 = vsel %vm469, %v472, %v475
    %v477 = vsel %vm467, nan, %v476
    %v478 = vld [vmem:[%s3] sm:$0x3]
    %v479 = vld [vmem:[#allocation7] sm:$0xff]
    %v480 = vld [vmem:[#allocation7 + $0x8] sm:$0xff]
    %v481 = vld [vmem:[#allocation7 + $0x10] sm:$0xff]
    %v482 = vld [vmem:[#allocation7 + $0x18] sm:$0xff]
    %v483 = vld [vmem:[#allocation7 + $0x20] sm:$0xff]
    %v484 = vld [vmem:[#allocation7 + $0x28] sm:$0xff]
    %v485 = vld [vmem:[#allocation7 + $0x30] sm:$0xff]
    %v486 = vld [vmem:[#allocation7 + $0x38] sm:$0xff]
    %v487 = vld [vmem:[#allocation7 + $0x40] sm:$0xff]
    %v488 = vld [vmem:[#allocation7 + $0x48] sm:$0xff]
    %v489 = vld [vmem:[#allocation7 + $0x50] sm:$0xff]
    %v490 = vld [vmem:[#allocation7 + $0x58] sm:$0xff]
    %v491 = vld [vmem:[#allocation7 + $0x60] sm:$0xff]
    %v492 = vld [vmem:[#allocation7 + $0x68] sm:$0xff]
    %v493 = vld [vmem:[#allocation7 + $0x70] sm:$0xff]
    %v494 = vld [vmem:[#allocation7 + $0x78] sm:$0xff]
    %v495 = vld [vmem:[#allocation7 + $0x80] sm:$0xff]
    %v496 = vld [vmem:[#allocation7 + $0x88] sm:$0xff]
    %v497 = vld [vmem:[#allocation7 + $0x90] sm:$0xff]
    %v498 = vld [vmem:[#allocation7 + $0x98] sm:$0xff]
    %v499 = vld [vmem:[#allocation7 + $0xa0] sm:$0xff]
    %v500 = vld [vmem:[#allocation7 + $0xa8] sm:$0xff]
    %v501 = vld [vmem:[#allocation7 + $0xb0] sm:$0xff]
    %v502 = vld [vmem:[#allocation7 + $0xb8] sm:$0xff]
    %v503 = vld [vmem:[#allocation7 + $0xc0] sm:$0xff]
    %v504 = vld [vmem:[#allocation7 + $0xc8] sm:$0xff]
    %v505 = vld [vmem:[#allocation7 + $0xd0] sm:$0xff]
    %v506 = vld [vmem:[#allocation7 + $0xd8] sm:$0xff]
    %v507 = vld [vmem:[#allocation7 + $0xe0] sm:$0xff]
    %v508 = vld [vmem:[#allocation7 + $0xe8] sm:$0xff]
    %v509 = vld [vmem:[#allocation7 + $0xf0] sm:$0xff]
    %v510 = vld [vmem:[#allocation7 + $0xf8] sm:$0xff]
    %v511 = vperm.slane %v478, 0
    %512 = vmatpush.msra.mxu0 %v494
    %513 = vmatpush.msra.mxu0 %v493
    %514 = vmatpush.msra.mxu0 %v492
    %515 = vmatpush.msra.mxu0 %v491
    %516 = vmatpush.msra.mxu0 %v490
    %517 = vmatpush.msra.mxu0 %v489
    %518 = vmatpush.msra.mxu0 %v488
    %519 = vmatpush.msra.mxu0 %v487
    %520 = vmatpush.msra.mxu0 %v486
    %521 = vmatpush.msra.mxu0 %v485
    %522 = vmatpush.msra.mxu0 %v484
    %523 = vmatpush.msra.mxu0 %v483
    %524 = vmatpush.msra.mxu0 %v482
    %525 = vmatpush.msra.mxu0 %v481
    %526 = vmatpush.msra.mxu0 %v480
    %527 = vmatpush.msra.mxu0 %v479
    %528 = vmatmul.f32.gmra.mxu0 %v323
    %v529 = vpop.f32.mrf.mxu0
    %v530 = vadd.f32 %v511, %v529
    %531 = vdwg.mxu0
    %532 = vmatpush.msra.mxu0 %v510
    %533 = vmatpush.msra.mxu0 %v509
    %534 = vmatpush.msra.mxu0 %v508
    %535 = vmatpush.msra.mxu0 %v507
    %536 = vmatpush.msra.mxu0 %v506
    %537 = vmatpush.msra.mxu0 %v505
    %538 = vmatpush.msra.mxu0 %v504
    %539 = vmatpush.msra.mxu0 %v503
    %540 = vmatpush.msra.mxu0 %v502
    %541 = vmatpush.msra.mxu0 %v501
    %542 = vmatpush.msra.mxu0 %v500
    %543 = vmatpush.msra.mxu0 %v499
    %544 = vmatpush.msra.mxu0 %v498
    %545 = vmatpush.msra.mxu0 %v497
    %546 = vmatpush.msra.mxu0 %v496
    %547 = vmatpush.msra.mxu0 %v495
    %548 = vmatmul.f32.gmra.mxu0 %v477
    %v549 = vpop.f32.mrf.mxu0
    %v550 = vadd.f32 %v530, %v549
    %551 = vdwg.mxu0
    %v552 = vxor.u32 %v550, 2147483648
    %v553 = vmul.f32 %v552, 1.442695
    %v554 = vpow.pop %v553
    %v555 = vadd.f32 %v554, 1.0
    %v556 = vrcp.pop %v555
    %v557 = vmul.f32 %v555, %v556
    %v558 = vsub.f32 1.0, %v557
    %v559 = vmul.f32 %v556, %v558
    %v560 = vadd.f32 %v556, %v559
    %vm561 = vweird.f32 %v555
    %vm562 = vweird.f32 %v556
    %vm563 = vmor %vm561, %vm562
    %v564 = vsel %vm563, %v556, %v560
    %v565 = vand.u32 2147483647, %v555
    %vm566 = vcmp.eq.f32.partialorder %v565, 8.507059e+37
    %v567 = vand.u32 %v555, 2147483648
    %v568 = vor.u32 1.1754944e-38, %v567
    %v569 = vsel %vm566, %v568, %v564
    %v570 = vmul.f32 1.0, %v569
    %v571 = vmul.f32 %v550, %v570
    %v572 = vld [vmem:[#allocation8] sm:$0xff]
    %v573 = vld [vmem:[#allocation8 + $0x8] sm:$0xff]
    %v574 = vld [vmem:[#allocation8 + $0x10] sm:$0xff]
    %v575 = vld [vmem:[#allocation8 + $0x18] sm:$0xff]
    %v576 = vld [vmem:[#allocation8 + $0x20] sm:$0xff]
    %v577 = vld [vmem:[#allocation8 + $0x28] sm:$0xff]
    %v578 = vld [vmem:[#allocation8 + $0x30] sm:$0xff]
    %v579 = vld [vmem:[#allocation8 + $0x38] sm:$0xff]
    %v580 = vld [vmem:[#allocation8 + $0x40] sm:$0xff]
    %v581 = vld [vmem:[#allocation8 + $0x48] sm:$0xff]
    %v582 = vld [vmem:[#allocation8 + $0x50] sm:$0xff]
    %v583 = vld [vmem:[#allocation8 + $0x58] sm:$0xff]
    %v584 = vld [vmem:[#allocation8 + $0x60] sm:$0xff]
    %v585 = vld [vmem:[#allocation8 + $0x68] sm:$0xff]
    %v586 = vld [vmem:[#allocation8 + $0x70] sm:$0xff]
    %v587 = vld [vmem:[#allocation8 + $0x78] sm:$0xff]
    %v588 = vperm.slane %v478, 1
    %589 = vmatpush.msra.mxu0 %v587
    %590 = vmatpush.msra.mxu0 %v586
    %591 = vmatpush.msra.mxu0 %v585
    %592 = vmatpush.msra.mxu0 %v584
    %593 = vmatpush.msra.mxu0 %v583
    %594 = vmatpush.msra.mxu0 %v582
    %595 = vmatpush.msra.mxu0 %v581
    %596 = vmatpush.msra.mxu0 %v580
    %597 = vmatpush.msra.mxu0 %v579
    %598 = vmatpush.msra.mxu0 %v578
    %599 = vmatpush.msra.mxu0 %v577
    %600 = vmatpush.msra.mxu0 %v576
    %601 = vmatpush.msra.mxu0 %v575
    %602 = vmatpush.msra.mxu0 %v574
    %603 = vmatpush.msra.mxu0 %v573
    %604 = vmatpush.msra.mxu0 %v572
    %605 = vmatmul.f32.gmra.mxu0 %v571
    %v606 = vpop.f32.mrf.mxu0
    %v607 = vadd.f32 %v588, %v606
    %608 = vdwg.mxu0
    %609 = vst [vmem:[#allocation10] sm:$0x3] %v607
    // Predicated region
    $region38: #{tpu_custom_call.1} parent=1 // pred_check
      _
    $region39: #{tpu_custom_call.1} parent=1 // pred_check_branch
      %611 = sbr.rel (0) target = $region41
    $region40: #{tpu_custom_call.1} parent=1 // pred_region
      %613 = vsyncadd [#allocation4], 0
      %s615 = sshll.u32 [#allocation10], 4
      %s616 = int_to_ptr.vmem [resolvable:$true] %s615
      %s617 = sshll.u32 %s5, 4
      %s618 = int_to_ptr.hbm [resolvable:$true] %s617
      %620 = dma.vmem_to_hbm [thread:$0]  %s616, 32, %s618, [#allocation4]
    $region41: #{tpu_custom_call.1} parent=1 // pred_fallthru
      _
    // Predicated region
    $region42: #{tpu_custom_call.1} parent=1 // pred_check
      _
    $region43: #{tpu_custom_call.1} parent=1 // pred_check_branch
      %622 = sbr.rel (0) target = $region45
    $region44: #{tpu_custom_call.1} parent=1 // pred_region
      %624 = dma.done [#allocation4], 32
    $region45: #{tpu_custom_call.1} parent=1 // pred_fallthru
      _
    %625 = vsyncpa [#allocation3], 1
    %626 = vsyncpa [#allocation6], 1
    %627 = vsyncpa [#allocation9], 1
    %628 = vsyncpa [#allocation4], 1

</llo_original>
